<compile_context>
chip_gen: v5e
topology: v5e:2x2
jax: 0.10.0
libtpu: 0.0.40
codegen_flags: <defaults>
</compile_context>

<pallas_src>
import jax
import jax.numpy as jnp
from jax.experimental import pallas as pl
from jax.experimental.pallas import tpu as pltpu

HIDDEN = 256
LANE = 128


def _round_up(x: int, m: int) -> int:
    return ((x + m - 1) // m) * m


def dirac_policy_kernel(x_ref, w1_ref, b1_ref, w2_ref, b2_ref, w3_ref, b3_ref,
                        out_ref):
    """Fused 3-layer MLP on one batch tile: relu -> relu -> tanh.

    Weights are bf16 (VMEM-resident across the batch grid), accumulation is
    f32 on the MXU, activations (ReLU/tanh + bias add) are f32 on the VPU/EUP.
    """
    x = x_ref[...]                                                      # (TB, S) f32

    h1 = jnp.dot(x.astype(jnp.bfloat16), w1_ref[...],
                 preferred_element_type=jnp.float32)                    # (TB, 256)
    h1 = jnp.maximum(h1 + b1_ref[...], 0.0)                             # ReLU (f32)

    h2 = jnp.dot(h1.astype(jnp.bfloat16), w2_ref[...],
                 preferred_element_type=jnp.float32)                    # (TB, 256)
    h2 = jnp.maximum(h2 + b2_ref[...], 0.0)                             # ReLU (f32)

    h3 = jnp.dot(h2.astype(jnp.bfloat16), w3_ref[...],
                 preferred_element_type=jnp.float32)                    # (TB, Ap)
    out_ref[...] = jnp.tanh(h3 + b3_ref[...]).astype(out_ref.dtype)     # tanh (f32)


def dirac_policy_forward(state, params, *, block_batch=1024):
    """Runs the MLP tiled over the batch dimension.

    state:  (B, state_dim) float32
    params: dict with w1 (S,256), b1 (1,256), w2 (256,256), b2 (1,256),
            w3 (256,A), b3 (1,A)   (any float dtype; cast internally)
    block_batch: rows per grid step (rounded to a multiple of 8, clipped to B).
                 ~1024-2048 is a good default; VMEM footprint stays a few MB.
    """
    w1, b1 = params["w1"], params["b1"]
    w2, b2 = params["w2"], params["b2"]
    w3, b3 = params["w3"], params["b3"]

    B, S = state.shape
    H = w1.shape[1]
    A = w3.shape[1]

    # ---- prepare parameters: bf16 weights, f32 biases, lane-dense last layer ----
    Ap = max(LANE, _round_up(A, LANE))          # pad out-features to a full lane width
    w1b = w1.astype(jnp.bfloat16)
    w2b = w2.astype(jnp.bfloat16)
    w3p = jnp.zeros((H, Ap), jnp.bfloat16).at[:, :A].set(w3.astype(jnp.bfloat16))
    b1f = b1.astype(jnp.float32)
    b2f = b2.astype(jnp.float32)
    b3p = jnp.zeros((1, Ap), jnp.float32).at[:, :A].set(b3.astype(jnp.float32))

    # ---- batch tiling ----
    TB = _round_up(max(8, min(block_batch, _round_up(B, 8))), 8)
    Bp = _round_up(B, TB)
    xs = state.astype(jnp.float32)
    if Bp != B:
        xs = jnp.pad(xs, ((0, Bp - B), (0, 0)))
    grid = (Bp // TB,)

    cost = pl.CostEstimate(
        flops=2 * Bp * (S * H + H * H + H * Ap),
        transcendentals=Bp * Ap,                 # tanh
        bytes_accessed=(Bp * S * 4                                   # x
                        + (S * H + H * H + H * Ap) * 2               # bf16 weights
                        + (H + H + Ap) * 4                           # biases
                        + Bp * Ap * 4),                              # output
    )

    out_padded = pl.pallas_call(
        dirac_policy_kernel,
        out_shape=jax.ShapeDtypeStruct((Bp, Ap), jnp.float32),
        grid=grid,
        in_specs=[
            pl.BlockSpec((TB, S), lambda i: (i, 0)),   # x tile: marches over batch
            pl.BlockSpec((S, H), lambda i: (0, 0)),    # weights/biases: resident
            pl.BlockSpec((1, H), lambda i: (0, 0)),
            pl.BlockSpec((H, H), lambda i: (0, 0)),
            pl.BlockSpec((1, H), lambda i: (0, 0)),
            pl.BlockSpec((H, Ap), lambda i: (0, 0)),
            pl.BlockSpec((1, Ap), lambda i: (0, 0)),
        ],
        out_specs=pl.BlockSpec((TB, Ap), lambda i: (i, 0)),  # lane-dense output tile
        compiler_params=pltpu.CompilerParams(
            dimension_semantics=("parallel",),      # shard batch tiles across TCs (v7x)
        ),
        cost_estimate=cost,
    )(xs, w1b, b1f, w2b, b2f, w3p, b3p)

    # drop batch padding and the zero-padded action columns
    return out_padded[:B, :A]


def init_params(key, state_dim, action_dim, hidden=HIDDEN):
    """Deterministic synthetic parameter init (PyTorch-Linear-like uniform)."""
    ks = jax.random.split(key, 6)

    def linear_init(kw, kb, fan_in, fan_out):
        bound = 1.0 / jnp.sqrt(jnp.float32(fan_in))
        w = jax.random.uniform(kw, (fan_in, fan_out), jnp.float32, -bound, bound)
        b = jax.random.uniform(kb, (1, fan_out), jnp.float32, -bound, bound)
        return w, b

    w1, b1 = linear_init(ks[0], ks[1], state_dim, hidden)
    w2, b2 = linear_init(ks[2], ks[3], hidden, hidden)
    w3, b3 = linear_init(ks[4], ks[5], hidden, action_dim)
    return {"w1": w1, "b1": b1, "w2": w2, "b2": b2, "w3": w3, "b3": b3}


if __name__ == "__main__":
    key = jax.random.PRNGKey(0)
    k_params, k_state = jax.random.split(key)

    batch = 256          # realistic-ish RL batch; exercises a 2-step grid at TB=128
    state_dim = 32
    action_dim = 8

    params = init_params(k_params, state_dim, action_dim)
    state = jax.random.normal(k_state, (batch, state_dim), jnp.float32)

    actions = dirac_policy_forward(state, params, block_batch=128)
    actions = jax.block_until_ready(actions)
    assert actions.shape == (batch, action_dim)

    # Reference that mirrors the kernel's numerics (bf16 matmul inputs, f32 accum).
    w1b = params["w1"].astype(jnp.bfloat16)
    w2b = params["w2"].astype(jnp.bfloat16)
    w3b = params["w3"].astype(jnp.bfloat16)
    h1 = jnp.maximum(
        jnp.dot(state.astype(jnp.bfloat16), w1b, preferred_element_type=jnp.float32)
        + params["b1"], 0.0)
    h2 = jnp.maximum(
        jnp.dot(h1.astype(jnp.bfloat16), w2b, preferred_element_type=jnp.float32)
        + params["b2"], 0.0)
    ref = jnp.tanh(
        jnp.dot(h2.astype(jnp.bfloat16), w3b, preferred_element_type=jnp.float32)
        + params["b3"])
    assert jnp.allclose(actions, ref, atol=1e-3, rtol=1e-3)

    # Sanity vs full-f32 math (loose: bf16 weights cost ~1e-2 abs near worst case).
    h1f = jnp.maximum(state @ params["w1"] + params["b1"], 0.0)
    h2f = jnp.maximum(h1f @ params["w2"] + params["b2"], 0.0)
    reff = jnp.tanh(h2f @ params["w3"] + params["b3"])
    assert jnp.max(jnp.abs(actions - reff)) < 5e-2

    print("KERNEL_OK")
</pallas_src>

<mosaic_0001>
module attributes {stable_mosaic.version = 11 : i64} {
  func.func @dirac_policy_kernel(%arg0: i32, %arg1: memref<128x32xf32, #tpu.memory_space<vmem>>, %arg2: memref<32x256xbf16, #tpu.memory_space<vmem>>, %arg3: memref<1x256xf32, #tpu.memory_space<vmem>>, %arg4: memref<256x256xbf16, #tpu.memory_space<vmem>>, %arg5: memref<1x256xf32, #tpu.memory_space<vmem>>, %arg6: memref<256x128xbf16, #tpu.memory_space<vmem>>, %arg7: memref<1x128xf32, #tpu.memory_space<vmem>>, %arg8: memref<128x128xf32, #tpu.memory_space<vmem>>) attributes {dimension_semantics = [#tpu.dimension_semantics<parallel>], iteration_bounds = array<i64: 2>, scalar_prefetch = 0 : i64, scratch_operands = 0 : i64, tpu.core_type = #tpu.core_type<tc>, window_params = [{transform_indices = @transform_0, window_bounds = array<i64: 128, 32>}, {pipeline_mode = #tpu.pipeline_mode<synchronous>, transform_indices = @transform_1, window_bounds = array<i64: 32, 256>}, {pipeline_mode = #tpu.pipeline_mode<synchronous>, transform_indices = @transform_2, window_bounds = array<i64: 1, 256>}, {pipeline_mode = #tpu.pipeline_mode<synchronous>, transform_indices = @transform_3, window_bounds = array<i64: 256, 256>}, {pipeline_mode = #tpu.pipeline_mode<synchronous>, transform_indices = @transform_4, window_bounds = array<i64: 1, 256>}, {pipeline_mode = #tpu.pipeline_mode<synchronous>, transform_indices = @transform_5, window_bounds = array<i64: 256, 128>}, {pipeline_mode = #tpu.pipeline_mode<synchronous>, transform_indices = @transform_6, window_bounds = array<i64: 1, 128>}, {transform_indices = @transform_7, window_bounds = array<i64: 128, 128>}]} {
    %c0 = arith.constant 0 : index
    %c0_0 = arith.constant 0 : index
    %0 = vector.load %arg1[%c0, %c0_0] : memref<128x32xf32, #tpu.memory_space<vmem>>, vector<128x32xf32>
    %1 = arith.truncf %0 : vector<128x32xf32> to vector<128x32xbf16>
    %c0_1 = arith.constant 0 : index
    %c0_2 = arith.constant 0 : index
    %2 = vector.load %arg2[%c0_1, %c0_2] : memref<32x256xbf16, #tpu.memory_space<vmem>>, vector<32x256xbf16>
    %cst = arith.constant dense<0.000000e+00> : vector<128x256xf32>
    %3 = tpu.matmul %1, %2, %cst {dimension_numbers = #tpu.dot_dimension_numbers<[1], [0], [0], [1], [0, 0, 1, 1], [], []>} : vector<128x32xbf16>, vector<32x256xbf16>, vector<128x256xf32> -> vector<128x256xf32>
    %c0_3 = arith.constant 0 : index
    %c0_4 = arith.constant 0 : index
    %4 = vector.load %arg3[%c0_3, %c0_4] : memref<1x256xf32, #tpu.memory_space<vmem>>, vector<1x256xf32>
    %5 = vector.broadcast %4 : vector<1x256xf32> to vector<128x256xf32>
    %6 = arith.addf %3, %5 : vector<128x256xf32>
    %cst_5 = arith.constant 0.000000e+00 : f32
    %7 = vector.broadcast %cst_5 : f32 to vector<128x256xf32>
    %8 = arith.maximumf %6, %7 : vector<128x256xf32>
    %9 = arith.truncf %8 : vector<128x256xf32> to vector<128x256xbf16>
    %c0_6 = arith.constant 0 : index
    %c0_7 = arith.constant 0 : index
    %10 = vector.load %arg4[%c0_6, %c0_7] : memref<256x256xbf16, #tpu.memory_space<vmem>>, vector<256x256xbf16>
    %cst_8 = arith.constant dense<0.000000e+00> : vector<128x256xf32>
    %11 = tpu.matmul %9, %10, %cst_8 {dimension_numbers = #tpu.dot_dimension_numbers<[1], [0], [0], [1], [0, 0, 1, 1], [], []>} : vector<128x256xbf16>, vector<256x256xbf16>, vector<128x256xf32> -> vector<128x256xf32>
    %c0_9 = arith.constant 0 : index
    %c0_10 = arith.constant 0 : index
    %12 = vector.load %arg5[%c0_9, %c0_10] : memref<1x256xf32, #tpu.memory_space<vmem>>, vector<1x256xf32>
    %13 = vector.broadcast %12 : vector<1x256xf32> to vector<128x256xf32>
    %14 = arith.addf %11, %13 : vector<128x256xf32>
    %cst_11 = arith.constant 0.000000e+00 : f32
    %15 = vector.broadcast %cst_11 : f32 to vector<128x256xf32>
    %16 = arith.maximumf %14, %15 : vector<128x256xf32>
    %17 = arith.truncf %16 : vector<128x256xf32> to vector<128x256xbf16>
    %c0_12 = arith.constant 0 : index
    %c0_13 = arith.constant 0 : index
    %18 = vector.load %arg6[%c0_12, %c0_13] : memref<256x128xbf16, #tpu.memory_space<vmem>>, vector<256x128xbf16>
    %cst_14 = arith.constant dense<0.000000e+00> : vector<128x128xf32>
    %19 = tpu.matmul %17, %18, %cst_14 {dimension_numbers = #tpu.dot_dimension_numbers<[1], [0], [0], [1], [0, 0, 1, 1], [], []>} : vector<128x256xbf16>, vector<256x128xbf16>, vector<128x128xf32> -> vector<128x128xf32>
    %c0_15 = arith.constant 0 : index
    %c0_16 = arith.constant 0 : index
    %20 = vector.load %arg7[%c0_15, %c0_16] : memref<1x128xf32, #tpu.memory_space<vmem>>, vector<1x128xf32>
    %21 = vector.broadcast %20 : vector<1x128xf32> to vector<128x128xf32>
    %22 = arith.addf %19, %21 : vector<128x128xf32>
    %23 = math.tanh %22 : vector<128x128xf32>
    %c0_17 = arith.constant 0 : index
    %c0_18 = arith.constant 0 : index
    %24 = vector.load %arg8[%c0_17, %c0_18] : memref<128x128xf32, #tpu.memory_space<vmem>>, vector<128x128xf32>
    tpu.vector_store %arg8[%c0_17, %c0_18], %23 {strides = array<i32>} : memref<128x128xf32, #tpu.memory_space<vmem>>, vector<128x128xf32>,
    return
  }
  func.func @transform_0(%arg0: i32) -> (i32, i32) {
    %c0_i32 = arith.constant 0 : i32
    %c0_i32_0 = arith.constant 0 : i32
    return %arg0, %c0_i32 : i32, i32
  }
  func.func @transform_1(%arg0: i32) -> (i32, i32) {
    %c0_i32 = arith.constant 0 : i32
    %c0_i32_0 = arith.constant 0 : i32
    %c0_i32_1 = arith.constant 0 : i32
    return %c0_i32, %c0_i32_0 : i32, i32
  }
  func.func @transform_2(%arg0: i32) -> (i32, i32) {
    %c0_i32 = arith.constant 0 : i32
    %c0_i32_0 = arith.constant 0 : i32
    %c0_i32_1 = arith.constant 0 : i32
    return %c0_i32, %c0_i32_0 : i32, i32
  }
  func.func @transform_3(%arg0: i32) -> (i32, i32) {
    %c0_i32 = arith.constant 0 : i32
    %c0_i32_0 = arith.constant 0 : i32
    %c0_i32_1 = arith.constant 0 : i32
    return %c0_i32, %c0_i32_0 : i32, i32
  }
  func.func @transform_4(%arg0: i32) -> (i32, i32) {
    %c0_i32 = arith.constant 0 : i32
    %c0_i32_0 = arith.constant 0 : i32
    %c0_i32_1 = arith.constant 0 : i32
    return %c0_i32, %c0_i32_0 : i32, i32
  }
  func.func @transform_5(%arg0: i32) -> (i32, i32) {
    %c0_i32 = arith.constant 0 : i32
    %c0_i32_0 = arith.constant 0 : i32
    %c0_i32_1 = arith.constant 0 : i32
    return %c0_i32, %c0_i32_0 : i32, i32
  }
  func.func @transform_6(%arg0: i32) -> (i32, i32) {
    %c0_i32 = arith.constant 0 : i32
    %c0_i32_0 = arith.constant 0 : i32
    %c0_i32_1 = arith.constant 0 : i32
    return %c0_i32, %c0_i32_0 : i32, i32
  }
  func.func @transform_7(%arg0: i32) -> (i32, i32) {
    %c0_i32 = arith.constant 0 : i32
    %c0_i32_0 = arith.constant 0 : i32
    return %arg0, %c0_i32 : i32, i32
  }
}

</mosaic_0001>

<llo_original>
// kernel: tpu_custom_call.1
$region0: #{tpu_custom_call.1}
  #allocation0 [shape = 'u32[]', space=smem, size = 0x4, offset = 0x4, fixed_abs, tag = 'smem constant byte address 0x4 - core index']
  #allocation1 [shape = 'u32[72,128]{1,0:T(1,128)}', space=vmem, size = 0x9000, scoped, tag = 'internal scratch']
  %s0 = inlined_call_operand.vmem [shape: f32[256,32], index: 0, kind: input, shape index: {}]
  %s1 = inlined_call_operand.vmem [shape: bf16[32,256], index: 1, kind: input, shape index: {}]
  %s2 = inlined_call_operand.vmem [shape: f32[1,256], index: 2, kind: input, shape index: {}]
  %s3 = inlined_call_operand.vmem [shape: bf16[256,256], index: 3, kind: input, shape index: {}]
  %s4 = inlined_call_operand.vmem [shape: f32[1,256], index: 4, kind: input, shape index: {}]
  %s5 = inlined_call_operand.hbm [shape: bf16[256,128], index: 5, kind: input, shape index: {}]
  %s6 = inlined_call_operand.vmem [shape: f32[1,128], index: 6, kind: input, shape index: {}]
  %s7 = inlined_call_operand.hbm [shape: f32[256,128], index: 7, kind: output, shape index: {}]
  %s8 = sld [smem:[#allocation0]]
  $region65: #{tpu_custom_call.1} parent=0
    _
  %s10 = ssub.s32 1, %s8
  %s11 = scalar_select 0, %s10, %s8
  $region1: #{tpu_custom_call.1} parent=0
    #allocation2 [shape = 'u8[65536]{0}', space=vmem, size = 0x10000, scoped, tag = 'input window, operand 5, single buffered']
    #allocation3 [shape = 's32[2]{0}', space=sflag, size = 0x8, scoped, tag = 'scoped memory for tpu_custom_call.1']
    #allocation4 [shape = 's32[2]{0}', space=sflag, size = 0x8, scoped, tag = 'scoped memory for tpu_custom_call.1']
    #allocation5 [shape = 'u8[131072]{0}', space=vmem, size = 0x20000, scoped, tag = 'output window, operand 0']
    %12 = vsyncpa [#allocation3], 0
    %13 = vsyncpa [#allocation4], 0
    %s14 = scalar_lea.sflag [#allocation4], 1
    %15 = vsyncpa %s14, 0
    loop: start=0, step=1, limit=4
    $region2: #{tpu_custom_call.1} parent=1 // loop_pre_header
      _
    $region3: #{tpu_custom_call.1} parent=1 // loop_header
      %s17 = sphi 0, %s21
      %p18 = scmp.ge.s32.totalorder %s17, 4
      %s27 = sphi 0, %s29
      %s30 = sphi 0, %s27
      %s31 = sphi 0, %s30
      %s47 = sphi 0, %s31
      %s51 = sphi 0, %s51
      %s53 = sphi 0, %s51
      %s54 = sphi 0, %s53
      %s68 = sphi 0, %s54
      %s72 = sphi 0, %s72
      %s74 = sphi 0, %s72
      %s75 = sphi 0, %s74
      %s89 = sphi 0, %s75
      %s93 = sphi 0, %s93
      %s95 = sphi 0, %s93
      %s96 = sphi 0, %s95
      %s110 = sphi 0, %s96
      %s114 = sphi 0, %s114
      %s116 = sphi 0, %s114
      %s117 = sphi 0, %s116
      %s131 = sphi 0, %s117
      %s135 = sphi 0, %s135
      %s137 = sphi 0, %s135
      %s138 = sphi 0, %s137
      %s152 = sphi 0, %s138
      %s156 = sphi 0, %s156
      %s158 = sphi 0, %s156
      %s159 = sphi 0, %s158
      %s173 = sphi 0, %s159
      %s179 = sphi 0, %s181
      %s182 = sphi 0, %s179
      %s183 = sphi 0, %s182
      %s199 = sphi 0, %s183
    $region4: #{tpu_custom_call.1} parent=1 // loop_header_branch
      %20 = sbr.rel (%p18) target = $region8
    $region5: #{tpu_custom_call.1} parent=1 // loop_body
      %s22 = ssub.s32 %s17, 1
      %s23 = ssub.s32 %s17, 2
      %s24 = sadd.s32 %s17, 1
      %s25 = ssub.s32 %s17, %s24
      %p26 = scmp.eq.s32.totalorder %s25, 0
      %s28 = sadd.s32 %s27, 1
      %s29 = scalar_select %p26, %s27, %s28
      %p32 = pneg %p26
      %p33 = scmp.eq.s32.totalorder %s17, 1
      %p34 = por %p32, %p33
      %p35 = scmp.ne.s32.totalorder %s27, %s30
      %p36 = scmp.eq.s32.totalorder %s17, 0
      %p37 = por %p35, %p36
      %p38 = scmp.ne.s32.totalorder %s27, %s30
      %p39 = scmp.eq.s32.totalorder %s22, 1
      %p40 = por %p38, %p39
      %p41 = scmp.ne.s32.totalorder %s30, %s31
      %p42 = scmp.eq.s32.totalorder %s22, 0
      %p43 = por %p41, %p42
      %p44 = scmp.ne.s32.totalorder %s30, %s31
      %p45 = scmp.eq.s32.totalorder %s23, 1
      %p46 = por %p44, %p45
      %p48 = scmp.ne.s32.totalorder %s31, %s47
      %p49 = scmp.eq.s32.totalorder %s23, 0
      %p50 = por %p48, %p49
      %s52 = sadd.s32 %s51, 1
      %p55 = scmp.eq.s32.totalorder %s17, 1
      %p56 = scmp.ne.s32.totalorder %s51, %s53
      %p57 = scmp.eq.s32.totalorder %s17, 0
      %p58 = por %p56, %p57
      %p59 = scmp.ne.s32.totalorder %s51, %s53
      %p60 = scmp.eq.s32.totalorder %s22, 1
      %p61 = por %p59, %p60
      %p62 = scmp.ne.s32.totalorder %s53, %s54
      %p63 = scmp.eq.s32.totalorder %s22, 0
      %p64 = por %p62, %p63
      %p65 = scmp.ne.s32.totalorder %s53, %s54
      %p66 = scmp.eq.s32.totalorder %s23, 1
      %p67 = por %p65, %p66
      %p69 = scmp.ne.s32.totalorder %s54, %s68
      %p70 = scmp.eq.s32.totalorder %s23, 0
      %p71 = por %p69, %p70
      %s73 = sadd.s32 %s72, 1
      %p76 = scmp.eq.s32.totalorder %s17, 1
      %p77 = scmp.ne.s32.totalorder %s72, %s74
      %p78 = scmp.eq.s32.totalorder %s17, 0
      %p79 = por %p77, %p78
      %p80 = scmp.ne.s32.totalorder %s72, %s74
      %p81 = scmp.eq.s32.totalorder %s22, 1
      %p82 = por %p80, %p81
      %p83 = scmp.ne.s32.totalorder %s74, %s75
      %p84 = scmp.eq.s32.totalorder %s22, 0
      %p85 = por %p83, %p84
      %p86 = scmp.ne.s32.totalorder %s74, %s75
      %p87 = scmp.eq.s32.totalorder %s23, 1
      %p88 = por %p86, %p87
      %p90 = scmp.ne.s32.totalorder %s75, %s89
      %p91 = scmp.eq.s32.totalorder %s23, 0
      %p92 = por %p90, %p91
      %s94 = sadd.s32 %s93, 1
      %p97 = scmp.eq.s32.totalorder %s17, 1
      %p98 = scmp.ne.s32.totalorder %s93, %s95
      %p99 = scmp.eq.s32.totalorder %s17, 0
      %p100 = por %p98, %p99
      %p101 = scmp.ne.s32.totalorder %s93, %s95
      %p102 = scmp.eq.s32.totalorder %s22, 1
      %p103 = por %p101, %p102
      %p104 = scmp.ne.s32.totalorder %s95, %s96
      %p105 = scmp.eq.s32.totalorder %s22, 0
      %p106 = por %p104, %p105
      %p107 = scmp.ne.s32.totalorder %s95, %s96
      %p108 = scmp.eq.s32.totalorder %s23, 1
      %p109 = por %p107, %p108
      %p111 = scmp.ne.s32.totalorder %s96, %s110
      %p112 = scmp.eq.s32.totalorder %s23, 0
      %p113 = por %p111, %p112
      %s115 = sadd.s32 %s114, 1
      %p118 = scmp.eq.s32.totalorder %s17, 1
      %p119 = scmp.ne.s32.totalorder %s114, %s116
      %p120 = scmp.eq.s32.totalorder %s17, 0
      %p121 = por %p119, %p120
      %p122 = scmp.ne.s32.totalorder %s114, %s116
      %p123 = scmp.eq.s32.totalorder %s22, 1
      %p124 = por %p122, %p123
      %p125 = scmp.ne.s32.totalorder %s116, %s117
      %p126 = scmp.eq.s32.totalorder %s22, 0
      %p127 = por %p125, %p126
      %p128 = scmp.ne.s32.totalorder %s116, %s117
      %p129 = scmp.eq.s32.totalorder %s23, 1
      %p130 = por %p128, %p129
      %p132 = scmp.ne.s32.totalorder %s117, %s131
      %p133 = scmp.eq.s32.totalorder %s23, 0
      %p134 = por %p132, %p133
      %s136 = sadd.s32 %s135, 1
      %p139 = scmp.eq.s32.totalorder %s17, 1
      %p140 = scmp.ne.s32.totalorder %s135, %s137
      %p141 = scmp.eq.s32.totalorder %s17, 0
      %p142 = por %p140, %p141
      %p143 = scmp.ne.s32.totalorder %s135, %s137
      %p144 = scmp.eq.s32.totalorder %s22, 1
      %p145 = por %p143, %p144
      %p146 = scmp.ne.s32.totalorder %s137, %s138
      %p147 = scmp.eq.s32.totalorder %s22, 0
      %p148 = por %p146, %p147
      %p149 = scmp.ne.s32.totalorder %s137, %s138
      %p150 = scmp.eq.s32.totalorder %s23, 1
      %p151 = por %p149, %p150
      %p153 = scmp.ne.s32.totalorder %s138, %s152
      %p154 = scmp.eq.s32.totalorder %s23, 0
      %p155 = por %p153, %p154
      %s157 = sadd.s32 %s156, 1
      %p160 = scmp.eq.s32.totalorder %s17, 1
      %p161 = scmp.ne.s32.totalorder %s156, %s158
      %p162 = scmp.eq.s32.totalorder %s17, 0
      %p163 = por %p161, %p162
      %p164 = scmp.ne.s32.totalorder %s156, %s158
      %p165 = scmp.eq.s32.totalorder %s22, 1
      %p166 = por %p164, %p165
      %p167 = scmp.ne.s32.totalorder %s158, %s159
      %p168 = scmp.eq.s32.totalorder %s22, 0
      %p169 = por %p167, %p168
      %p170 = scmp.ne.s32.totalorder %s158, %s159
      %p171 = scmp.eq.s32.totalorder %s23, 1
      %p172 = por %p170, %p171
      %p174 = scmp.ne.s32.totalorder %s159, %s173
      %p175 = scmp.eq.s32.totalorder %s23, 0
      %p176 = por %p174, %p175
      %s177 = ssub.s32 %s17, %s24
      %p178 = scmp.eq.s32.totalorder %s177, 0
      %s180 = sadd.s32 %s179, 1
      %s181 = scalar_select %p178, %s179, %s180
      %p184 = pneg %p178
      %p185 = scmp.eq.s32.totalorder %s17, 1
      %p186 = por %p184, %p185
      %p187 = scmp.ne.s32.totalorder %s179, %s182
      %p188 = scmp.eq.s32.totalorder %s17, 0
      %p189 = por %p187, %p188
      %p190 = scmp.ne.s32.totalorder %s179, %s182
      %p191 = scmp.eq.s32.totalorder %s22, 1
      %p192 = por %p190, %p191
      %p193 = scmp.ne.s32.totalorder %s182, %s183
      %p194 = scmp.eq.s32.totalorder %s22, 0
      %p195 = por %p193, %p194
      %p196 = scmp.ne.s32.totalorder %s182, %s183
      %p197 = scmp.eq.s32.totalorder %s23, 1
      %p198 = por %p196, %p197
      %p200 = scmp.ne.s32.totalorder %s183, %s199
      %p201 = scmp.eq.s32.totalorder %s23, 0
      %p202 = por %p200, %p201
      %p203 = scmp.le.s32.totalorder 1, %s17
      %p204 = scmp.lt.s32.totalorder %s17, 3
      %p205 = pnand %p203, %p204
      %p206 = pneg %p205
      // Predicated region
      $region9: #{tpu_custom_call.1} parent=5 // pred_check
        _
      $region10: #{tpu_custom_call.1} parent=5 // pred_check_branch
        %208 = sbr.rel (%p205) target = $region12
      $region11: #{tpu_custom_call.1} parent=5 // pred_region
        %s209 = ssub.s32 %s17, 1
        // Predicated region
        $region13: #{tpu_custom_call.1} parent=11 // pred_check
          %p210 = pneg %p64
        $region14: #{tpu_custom_call.1} parent=11 // pred_check_branch
          %212 = sbr.rel (%p210) target = $region16
        $region15: #{tpu_custom_call.1} parent=11 // pred_region
          _
        $region16: #{tpu_custom_call.1} parent=11 // pred_fallthru
          _
        // Predicated region
        $region17: #{tpu_custom_call.1} parent=11 // pred_check
          %p213 = pneg %p85
        $region18: #{tpu_custom_call.1} parent=11 // pred_check_branch
          %215 = sbr.rel (%p213) target = $region20
        $region19: #{tpu_custom_call.1} parent=11 // pred_region
          _
        $region20: #{tpu_custom_call.1} parent=11 // pred_fallthru
          _
        // Predicated region
        $region21: #{tpu_custom_call.1} parent=11 // pred_check
          %p216 = pneg %p106
        $region22: #{tpu_custom_call.1} parent=11 // pred_check_branch
          %218 = sbr.rel (%p216) target = $region24
        $region23: #{tpu_custom_call.1} parent=11 // pred_region
          _
        $region24: #{tpu_custom_call.1} parent=11 // pred_fallthru
          _
        // Predicated region
        $region25: #{tpu_custom_call.1} parent=11 // pred_check
          %p219 = pneg %p127
        $region26: #{tpu_custom_call.1} parent=11 // pred_check_branch
          %221 = sbr.rel (%p219) target = $region28
        $region27: #{tpu_custom_call.1} parent=11 // pred_region
          _
        $region28: #{tpu_custom_call.1} parent=11 // pred_fallthru
          _
        // Predicated region
        $region29: #{tpu_custom_call.1} parent=11 // pred_check
          %p222 = pneg %p148
        $region30: #{tpu_custom_call.1} parent=11 // pred_check_branch
          %224 = sbr.rel (%p222) target = $region32
        $region31: #{tpu_custom_call.1} parent=11 // pred_region
          %226 = vsyncadd [#allocation3], 0
          %s227 = sshll.u32 %s5, 4
          %s228 = int_to_ptr.hbm [resolvable:$true] %s227
          %s229 = sshll.u32 [#allocation2], 4
          %s230 = int_to_ptr.vmem [resolvable:$true] %s229
          %235 = dma.hbm_to_vmem [thread:$0]  %s228, 2048, %s230, [#allocation3], 64, 64, 4
        $region32: #{tpu_custom_call.1} parent=11 // pred_fallthru
          _
        // Predicated region
        $region33: #{tpu_custom_call.1} parent=11 // pred_check
          %p236 = pneg %p169
        $region34: #{tpu_custom_call.1} parent=11 // pred_check_branch
          %238 = sbr.rel (%p236) target = $region36
        $region35: #{tpu_custom_call.1} parent=11 // pred_region
          _
        $region36: #{tpu_custom_call.1} parent=11 // pred_fallthru
          _
      $region12: #{tpu_custom_call.1} parent=5 // pred_fallthru
        _
      %p239 = scmp.lt.s32.totalorder %s17, 2
      // Predicated region
      $region37: #{tpu_custom_call.1} parent=5 // pred_check
        %p240 = pneg %p239
      $region38: #{tpu_custom_call.1} parent=5 // pred_check_branch
        %242 = sbr.rel (%p240) target = $region40
      $region39: #{tpu_custom_call.1} parent=5 // pred_region
        // Predicated region
        $region41: #{tpu_custom_call.1} parent=39 // pred_check
          %p243 = pneg %p37
        $region42: #{tpu_custom_call.1} parent=39 // pred_check_branch
          %245 = sbr.rel (%p243) target = $region44
        $region43: #{tpu_custom_call.1} parent=39 // pred_region
          %s246 = smul.u32 16, %s17
          %p247 = scmp.lt.s32.totalorder %s246, 31
          %s248 = scalar_select %p247, %s246, 31
          %s249 = smul.addr %s248, 8
          %s250 = scalar_lea.vmem %s0, %s249
          %s251 = smul.u32 16, %s17
        $region44: #{tpu_custom_call.1} parent=39 // pred_fallthru
          _
      $region40: #{tpu_custom_call.1} parent=5 // pred_fallthru
        _
      %p252 = scmp.le.s32.totalorder 1, %s17
      %p253 = scmp.lt.s32.totalorder %s17, 3
      %p254 = pnand %p252, %p253
      %p255 = pneg %p254
      // Predicated region
      $region45: #{tpu_custom_call.1} parent=5 // pred_check
        _
      $region46: #{tpu_custom_call.1} parent=5 // pred_check_branch
        %257 = sbr.rel (%p254) target = $region48
      $region47: #{tpu_custom_call.1} parent=5 // pred_region
        %s258 = ssub.s32 %s17, 1
        // Predicated region
        $region49: #{tpu_custom_call.1} parent=47 // pred_check
          %p259 = pneg %p148
        $region50: #{tpu_custom_call.1} parent=47 // pred_check_branch
          %261 = sbr.rel (%p259) target = $region52
        $region51: #{tpu_custom_call.1} parent=47 // pred_region
          %263 = dma.done [#allocation3], 2048
        $region52: #{tpu_custom_call.1} parent=47 // pred_fallthru
          _
        %s264 = smul.u32 16, %s22
        %p265 = scmp.lt.s32.totalorder %s264, 31
        %s266 = scalar_select %p265, %s264, 31
        %s267 = smul.addr %s266, 8
        %s268 = scalar_lea.vmem %s0, %s267
        %p269 = pneg %p43
        %p270 = pneg %p40
        %p271 = pneg %p64
        %p272 = pneg %p61
        %p273 = pneg %p85
        %p274 = pneg %p82
        %p275 = pneg %p106
        %p276 = pneg %p103
        %p277 = pneg %p127
        %p278 = pneg %p124
        %p279 = pneg %p148
        %p280 = pneg %p145
        %p281 = pneg %p169
        %p282 = pneg %p166
        %p283 = pneg %p195
        %p284 = pneg %p192
        %s285 = sand.u32 %s182, 1
        %s286 = scalar_lea.sflag [#allocation4], %s285
        %s287 = sand.u32 %s182, 1
        %s288 = smul.addr %s287, 128
        %s289 = scalar_lea.vmem [#allocation5], %s288
        %s290 = smul.u32 16, %s22
        %p291 = scmp.lt.s32.totalorder %s290, 31
        %s292 = scalar_select %p291, %s290, 31
        %s293 = smul.addr %s292, 8
        %s294 = scalar_lea.vmem %s0, %s293
        %s295 = smul.u32 16, %s22
        %s296 = smul.u32 16, %s22
        %v298 = vld [vmem:[%s294] sm:$0xff]
        %v299 = vld [vmem:[%s294 + $0x8] sm:$0xff]
        %v300 = vld [vmem:[%s294 + $0x10] sm:$0xff]
        %v301 = vld [vmem:[%s294 + $0x18] sm:$0xff]
        %v302 = vld [vmem:[%s294 + $0x20] sm:$0xff]
        %v303 = vld [vmem:[%s294 + $0x28] sm:$0xff]
        %v304 = vld [vmem:[%s294 + $0x30] sm:$0xff]
        %v305 = vld [vmem:[%s294 + $0x38] sm:$0xff]
        %v306 = vld [vmem:[%s294 + $0x40] sm:$0xff]
        %v307 = vld [vmem:[%s294 + $0x48] sm:$0xff]
        %v308 = vld [vmem:[%s294 + $0x50] sm:$0xff]
        %v309 = vld [vmem:[%s294 + $0x58] sm:$0xff]
        %v310 = vld [vmem:[%s294 + $0x60] sm:$0xff]
        %v311 = vld [vmem:[%s294 + $0x68] sm:$0xff]
        %v312 = vld [vmem:[%s294 + $0x70] sm:$0xff]
        %v313 = vld [vmem:[%s294 + $0x78] sm:$0xff]
        %v314 = vpack.c.bf16 %v299, %v298
        %v315 = vpack.c.bf16 %v301, %v300
        %v316 = vpack.c.bf16 %v303, %v302
        %v317 = vpack.c.bf16 %v305, %v304
        %v318 = vpack.c.bf16 %v307, %v306
        %v319 = vpack.c.bf16 %v309, %v308
        %v320 = vpack.c.bf16 %v311, %v310
        %v321 = vpack.c.bf16 %v313, %v312
        %v322 = vld [vmem:[%s1] sm:$0xff]
        %v323 = vld [vmem:[%s1 + $0x8] sm:$0xff]
        %v324 = vld [vmem:[%s1 + $0x10] sm:$0xff]
        %v325 = vld [vmem:[%s1 + $0x18] sm:$0xff]
        %v326 = vld [vmem:[%s2] sm:$0x3]
        %v328 = vperm.slane %v326, 0
        %v329 = vperm.slane %v326, 1
        %v336 = vunpack.c.l.b16 %v322
        %v337 = vunpack.c.h.b16 %v322
        %v338 = vunpack.c.l.b16 %v323
        %v339 = vunpack.c.h.b16 %v323
        %v340 = vunpack.c.l.b16 %v324
        %v341 = vunpack.c.h.b16 %v324
        %v342 = vunpack.c.l.b16 %v325
        %v343 = vunpack.c.h.b16 %v325
        %v344 = vpack.c.b16 %v338, %v336
        %v345 = vpack.c.b16 %v339, %v337
        %v346 = vpack.c.b16 %v342, %v340
        %v347 = vpack.c.b16 %v343, %v341
        %vm352 = vcmask 261120
        %v354 = vsel %vm352, %v314, 0
        %v357 = vsel %vm352, %v315, 0
        %v360 = vsel %vm352, %v316, 0
        %v363 = vsel %vm352, %v317, 0
        %v366 = vsel %vm352, %v318, 0
        %v369 = vsel %vm352, %v319, 0
        %v372 = vsel %vm352, %v320, 0
        %v375 = vsel %vm352, %v321, 0
        %377 = vmatpush.bf16.msra.mxu0 0
        %378 = vmatpush.bf16.msra.mxu0 0
        %379 = vmatpush.bf16.msra.mxu0 0
        %380 = vmatpush.bf16.msra.mxu0 0
        %381 = vmatpush.bf16.msra.mxu0 0
        %382 = vmatpush.bf16.msra.mxu0 0
        %383 = vmatpush.bf16.msra.mxu0 %v346
        %384 = vmatpush.bf16.msra.mxu0 %v344
        %385 = vmatmul.bf16.gmra.mxu0 %v354
        %v386 = vpop.f32.mrf.mxu0
        %v387 = vadd.f32 %v328, %v386
        %v388 = vpop.f32.mrf.mxu0
        %v389 = vadd.f32 %v328, %v388
        %390 = vmatmul.bf16.gmra.mxu0 %v357
        %v391 = vpop.f32.mrf.mxu0
        %v392 = vadd.f32 %v328, %v391
        %v393 = vpop.f32.mrf.mxu0
        %v394 = vadd.f32 %v328, %v393
        %395 = vmatmul.bf16.gmra.mxu0 %v360
        %v396 = vpop.f32.mrf.mxu0
        %v397 = vadd.f32 %v328, %v396
        %v398 = vpop.f32.mrf.mxu0
        %v399 = vadd.f32 %v328, %v398
        %400 = vmatmul.bf16.gmra.mxu0 %v363
        %v401 = vpop.f32.mrf.mxu0
        %v402 = vadd.f32 %v328, %v401
        %v403 = vpop.f32.mrf.mxu0
        %v404 = vadd.f32 %v328, %v403
        %405 = vmatmul.bf16.gmra.mxu0 %v366
        %v406 = vpop.f32.mrf.mxu0
        %v407 = vadd.f32 %v328, %v406
        %v408 = vpop.f32.mrf.mxu0
        %v409 = vadd.f32 %v328, %v408
        %410 = vmatmul.bf16.gmra.mxu0 %v369
        %v411 = vpop.f32.mrf.mxu0
        %v412 = vadd.f32 %v328, %v411
        %v413 = vpop.f32.mrf.mxu0
        %v414 = vadd.f32 %v328, %v413
        %415 = vmatmul.bf16.gmra.mxu0 %v372
        %v416 = vpop.f32.mrf.mxu0
        %v417 = vadd.f32 %v328, %v416
        %v418 = vpop.f32.mrf.mxu0
        %v419 = vadd.f32 %v328, %v418
        %420 = vmatmul.bf16.gmra.mxu0 %v375
        %v421 = vpop.f32.mrf.mxu0
        %v422 = vadd.f32 %v328, %v421
        %v423 = vpop.f32.mrf.mxu0
        %v424 = vadd.f32 %v328, %v423
        %425 = vdwg.mxu0
        %426 = vmatpush.bf16.msra.mxu0 0
        %427 = vmatpush.bf16.msra.mxu0 0
        %428 = vmatpush.bf16.msra.mxu0 0
        %429 = vmatpush.bf16.msra.mxu0 0
        %430 = vmatpush.bf16.msra.mxu0 0
        %431 = vmatpush.bf16.msra.mxu0 0
        %432 = vmatpush.bf16.msra.mxu0 %v347
        %433 = vmatpush.bf16.msra.mxu0 %v345
        %434 = vmatmul.bf16.gmra.mxu0 %v354
        %v435 = vpop.f32.mrf.mxu0
        %v436 = vadd.f32 %v329, %v435
        %v437 = vpop.f32.mrf.mxu0
        %v438 = vadd.f32 %v329, %v437
        %439 = vmatmul.bf16.gmra.mxu0 %v357
        %v440 = vpop.f32.mrf.mxu0
        %v441 = vadd.f32 %v329, %v440
        %v442 = vpop.f32.mrf.mxu0
        %v443 = vadd.f32 %v329, %v442
        %444 = vmatmul.bf16.gmra.mxu0 %v360
        %v445 = vpop.f32.mrf.mxu0
        %v446 = vadd.f32 %v329, %v445
        %v447 = vpop.f32.mrf.mxu0
        %v448 = vadd.f32 %v329, %v447
        %449 = vmatmul.bf16.gmra.mxu0 %v363
        %v450 = vpop.f32.mrf.mxu0
        %v451 = vadd.f32 %v329, %v450
        %v452 = vpop.f32.mrf.mxu0
        %v453 = vadd.f32 %v329, %v452
        %454 = vmatmul.bf16.gmra.mxu0 %v366
        %v455 = vpop.f32.mrf.mxu0
        %v456 = vadd.f32 %v329, %v455
        %v457 = vpop.f32.mrf.mxu0
        %v458 = vadd.f32 %v329, %v457
        %459 = vmatmul.bf16.gmra.mxu0 %v369
        %v460 = vpop.f32.mrf.mxu0
        %v461 = vadd.f32 %v329, %v460
        %v462 = vpop.f32.mrf.mxu0
        %v463 = vadd.f32 %v329, %v462
        %464 = vmatmul.bf16.gmra.mxu0 %v372
        %v465 = vpop.f32.mrf.mxu0
        %v466 = vadd.f32 %v329, %v465
        %v467 = vpop.f32.mrf.mxu0
        %v468 = vadd.f32 %v329, %v467
        %469 = vmatmul.bf16.gmra.mxu0 %v375
        %v470 = vpop.f32.mrf.mxu0
        %v471 = vadd.f32 %v329, %v470
        %v472 = vpop.f32.mrf.mxu0
        %v473 = vadd.f32 %v329, %v472
        %474 = vdwg.mxu0
        %v475 = vmax.f32 %v387, 0.0
        %v476 = vmax.f32 %v436, 0.0
        %v477 = vmax.f32 %v389, 0.0
        %v478 = vmax.f32 %v438, 0.0
        %v479 = vmax.f32 %v392, 0.0
        %v480 = vmax.f32 %v441, 0.0
        %v481 = vmax.f32 %v394, 0.0
        %v482 = vmax.f32 %v443, 0.0
        %v483 = vmax.f32 %v397, 0.0
        %v484 = vmax.f32 %v446, 0.0
        %v485 = vmax.f32 %v399, 0.0
        %v486 = vmax.f32 %v448, 0.0
        %v487 = vmax.f32 %v402, 0.0
        %v488 = vmax.f32 %v451, 0.0
        %v489 = vmax.f32 %v404, 0.0
        %v490 = vmax.f32 %v453, 0.0
        %v491 = vmax.f32 %v407, 0.0
        %v492 = vmax.f32 %v456, 0.0
        %v493 = vmax.f32 %v409, 0.0
        %v494 = vmax.f32 %v458, 0.0
        %v495 = vmax.f32 %v412, 0.0
        %v496 = vmax.f32 %v461, 0.0
        %v497 = vmax.f32 %v414, 0.0
        %v498 = vmax.f32 %v463, 0.0
        %v499 = vmax.f32 %v417, 0.0
        %v500 = vmax.f32 %v466, 0.0
        %v501 = vmax.f32 %v419, 0.0
        %v502 = vmax.f32 %v468, 0.0
        %v503 = vmax.f32 %v422, 0.0
        %v504 = vmax.f32 %v471, 0.0
        %v505 = vmax.f32 %v424, 0.0
        %v506 = vmax.f32 %v473, 0.0
        %v507 = vpack.c.bf16 %v477, %v475
        %v508 = vpack.c.bf16 %v478, %v476
        %v509 = vpack.c.bf16 %v481, %v479
        %v510 = vpack.c.bf16 %v482, %v480
        %v511 = vpack.c.bf16 %v485, %v483
        %v512 = vpack.c.bf16 %v486, %v484
        %v513 = vpack.c.bf16 %v489, %v487
        %v514 = vpack.c.bf16 %v490, %v488
        %v515 = vpack.c.bf16 %v493, %v491
        %v516 = vpack.c.bf16 %v494, %v492
        %v517 = vpack.c.bf16 %v497, %v495
        %v518 = vpack.c.bf16 %v498, %v496
        %v519 = vpack.c.bf16 %v501, %v499
        %v520 = vpack.c.bf16 %v502, %v500
        %v521 = vpack.c.bf16 %v505, %v503
        %v522 = vpack.c.bf16 %v506, %v504
        %v523 = vld [vmem:[%s3] sm:$0xff]
        %v524 = vld [vmem:[%s3 + $0x8] sm:$0xff]
        %v525 = vld [vmem:[%s3 + $0x10] sm:$0xff]
        %v526 = vld [vmem:[%s3 + $0x18] sm:$0xff]
        %v527 = vld [vmem:[%s3 + $0x20] sm:$0xff]
        %v528 = vld [vmem:[%s3 + $0x28] sm:$0xff]
        %v529 = vld [vmem:[%s3 + $0x30] sm:$0xff]
        %v530 = vld [vmem:[%s3 + $0x38] sm:$0xff]
        %v531 = vld [vmem:[%s3 + $0x40] sm:$0xff]
        %v532 = vld [vmem:[%s3 + $0x48] sm:$0xff]
        %v533 = vld [vmem:[%s3 + $0x50] sm:$0xff]
        %v534 = vld [vmem:[%s3 + $0x58] sm:$0xff]
        %v535 = vld [vmem:[%s3 + $0x60] sm:$0xff]
        %v536 = vld [vmem:[%s3 + $0x68] sm:$0xff]
        %v537 = vld [vmem:[%s3 + $0x70] sm:$0xff]
        %v538 = vld [vmem:[%s3 + $0x78] sm:$0xff]
        %v539 = vld [vmem:[%s3 + $0x80] sm:$0xff]
        %v540 = vld [vmem:[%s3 + $0x88] sm:$0xff]
        %v541 = vld [vmem:[%s3 + $0x90] sm:$0xff]
        %v542 = vld [vmem:[%s3 + $0x98] sm:$0xff]
        %v543 = vld [vmem:[%s3 + $0xa0] sm:$0xff]
        %v544 = vld [vmem:[%s3 + $0xa8] sm:$0xff]
        %v545 = vld [vmem:[%s3 + $0xb0] sm:$0xff]
        %v546 = vld [vmem:[%s3 + $0xb8] sm:$0xff]
        %v547 = vld [vmem:[%s3 + $0xc0] sm:$0xff]
        %v548 = vld [vmem:[%s3 + $0xc8] sm:$0xff]
        %v549 = vld [vmem:[%s3 + $0xd0] sm:$0xff]
        %v550 = vld [vmem:[%s3 + $0xd8] sm:$0xff]
        %v551 = vld [vmem:[%s3 + $0xe0] sm:$0xff]
        %v552 = vld [vmem:[%s3 + $0xe8] sm:$0xff]
        %v553 = vld [vmem:[%s3 + $0xf0] sm:$0xff]
        %v554 = vld [vmem:[%s3 + $0xf8] sm:$0xff]
        %v555 = vld [vmem:[%s4] sm:$0x3]
        %v557 = vperm.slane %v555, 0
        %v558 = vperm.slane %v555, 1
        %v593 = vunpack.c.l.b16 %v523
        %v594 = vunpack.c.h.b16 %v523
        %v595 = vunpack.c.l.b16 %v524
        %v596 = vunpack.c.h.b16 %v524
        %v597 = vunpack.c.l.b16 %v525
        %v598 = vunpack.c.h.b16 %v525
        %v599 = vunpack.c.l.b16 %v526
        %v600 = vunpack.c.h.b16 %v526
        %v601 = vunpack.c.l.b16 %v527
        %v602 = vunpack.c.h.b16 %v527
        %v603 = vunpack.c.l.b16 %v528
        %v604 = vunpack.c.h.b16 %v528
        %v605 = vunpack.c.l.b16 %v529
        %v606 = vunpack.c.h.b16 %v529
        %v607 = vunpack.c.l.b16 %v530
        %v608 = vunpack.c.h.b16 %v530
        %v609 = vunpack.c.l.b16 %v531
        %v610 = vunpack.c.h.b16 %v531
        %v611 = vunpack.c.l.b16 %v532
        %v612 = vunpack.c.h.b16 %v532
        %v613 = vunpack.c.l.b16 %v533
        %v614 = vunpack.c.h.b16 %v533
        %v615 = vunpack.c.l.b16 %v534
        %v616 = vunpack.c.h.b16 %v534
        %v617 = vunpack.c.l.b16 %v535
        %v618 = vunpack.c.h.b16 %v535
        %v619 = vunpack.c.l.b16 %v536
        %v620 = vunpack.c.h.b16 %v536
        %v621 = vunpack.c.l.b16 %v537
        %v622 = vunpack.c.h.b16 %v537
        %v623 = vunpack.c.l.b16 %v538
        %v624 = vunpack.c.h.b16 %v538
        %v625 = vunpack.c.l.b16 %v539
        %v626 = vunpack.c.h.b16 %v539
        %v627 = vunpack.c.l.b16 %v540
        %v628 = vunpack.c.h.b16 %v540
        %v629 = vunpack.c.l.b16 %v541
        %v630 = vunpack.c.h.b16 %v541
        %v631 = vunpack.c.l.b16 %v542
        %v632 = vunpack.c.h.b16 %v542
        %v633 = vunpack.c.l.b16 %v543
        %v634 = vunpack.c.h.b16 %v543
        %v635 = vunpack.c.l.b16 %v544
        %v636 = vunpack.c.h.b16 %v544
        %v637 = vunpack.c.l.b16 %v545
        %v638 = vunpack.c.h.b16 %v545
        %v639 = vunpack.c.l.b16 %v546
        %v640 = vunpack.c.h.b16 %v546
        %v641 = vunpack.c.l.b16 %v547
        %v642 = vunpack.c.h.b16 %v547
        %v643 = vunpack.c.l.b16 %v548
        %v644 = vunpack.c.h.b16 %v548
        %v645 = vunpack.c.l.b16 %v549
        %v646 = vunpack.c.h.b16 %v549
        %v647 = vunpack.c.l.b16 %v550
        %v648 = vunpack.c.h.b16 %v550
        %v649 = vunpack.c.l.b16 %v551
        %v650 = vunpack.c.h.b16 %v551
        %v651 = vunpack.c.l.b16 %v552
        %v652 = vunpack.c.h.b16 %v552
        %v653 = vunpack.c.l.b16 %v553
        %v654 = vunpack.c.h.b16 %v553
        %v655 = vunpack.c.l.b16 %v554
        %v656 = vunpack.c.h.b16 %v554
        %v657 = vpack.c.b16 %v595, %v593
        %v658 = vpack.c.b16 %v596, %v594
        %v659 = vpack.c.b16 %v599, %v597
        %v660 = vpack.c.b16 %v600, %v598
        %v661 = vpack.c.b16 %v603, %v601
        %v662 = vpack.c.b16 %v604, %v602
        %v663 = vpack.c.b16 %v607, %v605
        %v664 = vpack.c.b16 %v608, %v606
        %v665 = vpack.c.b16 %v611, %v609
        %v666 = vpack.c.b16 %v612, %v610
        %v667 = vpack.c.b16 %v615, %v613
        %v668 = vpack.c.b16 %v616, %v614
        %v669 = vpack.c.b16 %v619, %v617
        %v670 = vpack.c.b16 %v620, %v618
        %v671 = vpack.c.b16 %v623, %v621
        %v672 = vpack.c.b16 %v624, %v622
        %v673 = vpack.c.b16 %v627, %v625
        %v674 = vpack.c.b16 %v628, %v626
        %v675 = vpack.c.b16 %v631, %v629
        %v676 = vpack.c.b16 %v632, %v630
        %v677 = vpack.c.b16 %v635, %v633
        %v678 = vpack.c.b16 %v636, %v634
        %v679 = vpack.c.b16 %v639, %v637
        %v680 = vpack.c.b16 %v640, %v638
        %v681 = vpack.c.b16 %v643, %v641
        %v682 = vpack.c.b16 %v644, %v642
        %v683 = vpack.c.b16 %v647, %v645
        %v684 = vpack.c.b16 %v648, %v646
        %v685 = vpack.c.b16 %v651, %v649
        %v686 = vpack.c.b16 %v652, %v650
        %v687 = vpack.c.b16 %v655, %v653
        %v688 = vpack.c.b16 %v656, %v654
        %721 = vmatpush.bf16.msra.mxu0 %v671
        %722 = vmatpush.bf16.msra.mxu0 %v669
        %723 = vmatpush.bf16.msra.mxu0 %v667
        %724 = vmatpush.bf16.msra.mxu0 %v665
        %725 = vmatpush.bf16.msra.mxu0 %v663
        %726 = vmatpush.bf16.msra.mxu0 %v661
        %727 = vmatpush.bf16.msra.mxu0 %v659
        %728 = vmatpush.bf16.msra.mxu0 %v657
        %729 = vmatmul.bf16.gmra.mxu0 %v507
        %v730 = vpop.f32.mrf.mxu0
        %v731 = vadd.f32 %v557, %v730
        %v732 = vpop.f32.mrf.mxu0
        %v733 = vadd.f32 %v557, %v732
        %734 = vmatmul.bf16.gmra.mxu0 %v509
        %v735 = vpop.f32.mrf.mxu0
        %v736 = vadd.f32 %v557, %v735
        %v737 = vpop.f32.mrf.mxu0
        %v738 = vadd.f32 %v557, %v737
        %739 = vmatmul.bf16.gmra.mxu0 %v511
        %v740 = vpop.f32.mrf.mxu0
        %v741 = vadd.f32 %v557, %v740
        %v742 = vpop.f32.mrf.mxu0
        %v743 = vadd.f32 %v557, %v742
        %744 = vmatmul.bf16.gmra.mxu0 %v513
        %v745 = vpop.f32.mrf.mxu0
        %v746 = vadd.f32 %v557, %v745
        %v747 = vpop.f32.mrf.mxu0
        %v748 = vadd.f32 %v557, %v747
        %749 = vmatmul.bf16.gmra.mxu0 %v515
        %v750 = vpop.f32.mrf.mxu0
        %v751 = vadd.f32 %v557, %v750
        %v752 = vpop.f32.mrf.mxu0
        %v753 = vadd.f32 %v557, %v752
        %754 = vmatmul.bf16.gmra.mxu0 %v517
        %v755 = vpop.f32.mrf.mxu0
        %v756 = vadd.f32 %v557, %v755
        %v757 = vpop.f32.mrf.mxu0
        %v758 = vadd.f32 %v557, %v757
        %759 = vmatmul.bf16.gmra.mxu0 %v519
        %v760 = vpop.f32.mrf.mxu0
        %v761 = vadd.f32 %v557, %v760
        %v762 = vpop.f32.mrf.mxu0
        %v763 = vadd.f32 %v557, %v762
        %764 = vmatmul.bf16.gmra.mxu0 %v521
        %v765 = vpop.f32.mrf.mxu0
        %v766 = vadd.f32 %v557, %v765
        %v767 = vpop.f32.mrf.mxu0
        %v768 = vadd.f32 %v557, %v767
        %769 = vdwg.mxu0
        %770 = vmatpush.bf16.msra.mxu0 %v687
        %771 = vmatpush.bf16.msra.mxu0 %v685
        %772 = vmatpush.bf16.msra.mxu0 %v683
        %773 = vmatpush.bf16.msra.mxu0 %v681
        %774 = vmatpush.bf16.msra.mxu0 %v679
        %775 = vmatpush.bf16.msra.mxu0 %v677
        %776 = vmatpush.bf16.msra.mxu0 %v675
        %777 = vmatpush.bf16.msra.mxu0 %v673
        %778 = vmatmul.bf16.gmra.mxu0 %v508
        %v779 = vpop.f32.mrf.mxu0
        %v780 = vadd.f32 %v731, %v779
        %v781 = vpop.f32.mrf.mxu0
        %v782 = vadd.f32 %v733, %v781
        %783 = vmatmul.bf16.gmra.mxu0 %v510
        %v784 = vpop.f32.mrf.mxu0
        %v785 = vadd.f32 %v736, %v784
        %v786 = vpop.f32.mrf.mxu0
        %v787 = vadd.f32 %v738, %v786
        %788 = vmatmul.bf16.gmra.mxu0 %v512
        %v789 = vpop.f32.mrf.mxu0
        %v790 = vadd.f32 %v741, %v789
        %v791 = vpop.f32.mrf.mxu0
        %v792 = vadd.f32 %v743, %v791
        %793 = vmatmul.bf16.gmra.mxu0 %v514
        %v794 = vpop.f32.mrf.mxu0
        %v795 = vadd.f32 %v746, %v794
        %v796 = vpop.f32.mrf.mxu0
        %v797 = vadd.f32 %v748, %v796
        %798 = vmatmul.bf16.gmra.mxu0 %v516
        %v799 = vpop.f32.mrf.mxu0
        %v800 = vadd.f32 %v751, %v799
        %v801 = vpop.f32.mrf.mxu0
        %v802 = vadd.f32 %v753, %v801
        %803 = vmatmul.bf16.gmra.mxu0 %v518
        %v804 = vpop.f32.mrf.mxu0
        %v805 = vadd.f32 %v756, %v804
        %v806 = vpop.f32.mrf.mxu0
        %v807 = vadd.f32 %v758, %v806
        %808 = vmatmul.bf16.gmra.mxu0 %v520
        %v809 = vpop.f32.mrf.mxu0
        %v810 = vadd.f32 %v761, %v809
        %v811 = vpop.f32.mrf.mxu0
        %v812 = vadd.f32 %v763, %v811
        %813 = vmatmul.bf16.gmra.mxu0 %v522
        %v814 = vpop.f32.mrf.mxu0
        %v815 = vadd.f32 %v766, %v814
        %v816 = vpop.f32.mrf.mxu0
        %v817 = vadd.f32 %v768, %v816
        %818 = vdwg.mxu0
        %819 = vmatpush.bf16.msra.mxu0 %v672
        %820 = vmatpush.bf16.msra.mxu0 %v670
        %821 = vmatpush.bf16.msra.mxu0 %v668
        %822 = vmatpush.bf16.msra.mxu0 %v666
        %823 = vmatpush.bf16.msra.mxu0 %v664
        %824 = vmatpush.bf16.msra.mxu0 %v662
        %825 = vmatpush.bf16.msra.mxu0 %v660
        %826 = vmatpush.bf16.msra.mxu0 %v658
        %827 = vmatmul.bf16.gmra.mxu0 %v507
        %v828 = vpop.f32.mrf.mxu0
        %v829 = vadd.f32 %v558, %v828
        %v830 = vpop.f32.mrf.mxu0
        %v831 = vadd.f32 %v558, %v830
        %832 = vmatmul.bf16.gmra.mxu0 %v509
        %v833 = vpop.f32.mrf.mxu0
        %v834 = vadd.f32 %v558, %v833
        %v835 = vpop.f32.mrf.mxu0
        %v836 = vadd.f32 %v558, %v835
        %837 = vmatmul.bf16.gmra.mxu0 %v511
        %v838 = vpop.f32.mrf.mxu0
        %v839 = vadd.f32 %v558, %v838
        %v840 = vpop.f32.mrf.mxu0
        %v841 = vadd.f32 %v558, %v840
        %842 = vmatmul.bf16.gmra.mxu0 %v513
        %v843 = vpop.f32.mrf.mxu0
        %v844 = vadd.f32 %v558, %v843
        %v845 = vpop.f32.mrf.mxu0
        %v846 = vadd.f32 %v558, %v845
        %847 = vmatmul.bf16.gmra.mxu0 %v515
        %v848 = vpop.f32.mrf.mxu0
        %v849 = vadd.f32 %v558, %v848
        %v850 = vpop.f32.mrf.mxu0
        %v851 = vadd.f32 %v558, %v850
        %852 = vmatmul.bf16.gmra.mxu0 %v517
        %v853 = vpop.f32.mrf.mxu0
        %v854 = vadd.f32 %v558, %v853
        %v855 = vpop.f32.mrf.mxu0
        %v856 = vadd.f32 %v558, %v855
        %857 = vmatmul.bf16.gmra.mxu0 %v519
        %v858 = vpop.f32.mrf.mxu0
        %v859 = vadd.f32 %v558, %v858
        %v860 = vpop.f32.mrf.mxu0
        %v861 = vadd.f32 %v558, %v860
        %862 = vmatmul.bf16.gmra.mxu0 %v521
        %v863 = vpop.f32.mrf.mxu0
        %v864 = vadd.f32 %v558, %v863
        %v865 = vpop.f32.mrf.mxu0
        %v866 = vadd.f32 %v558, %v865
        %867 = vdwg.mxu0
        %868 = vmatpush.bf16.msra.mxu0 %v688
        %869 = vmatpush.bf16.msra.mxu0 %v686
        %870 = vmatpush.bf16.msra.mxu0 %v684
        %871 = vmatpush.bf16.msra.mxu0 %v682
        %872 = vmatpush.bf16.msra.mxu0 %v680
        %873 = vmatpush.bf16.msra.mxu0 %v678
        %874 = vmatpush.bf16.msra.mxu0 %v676
        %875 = vmatpush.bf16.msra.mxu0 %v674
        %876 = vmatmul.bf16.gmra.mxu0 %v508
        %v877 = vpop.f32.mrf.mxu0
        %v878 = vadd.f32 %v829, %v877
        %v879 = vpop.f32.mrf.mxu0
        %v880 = vadd.f32 %v831, %v879
        %881 = vmatmul.bf16.gmra.mxu0 %v510
        %v882 = vpop.f32.mrf.mxu0
        %v883 = vadd.f32 %v834, %v882
        %v884 = vpop.f32.mrf.mxu0
        %v885 = vadd.f32 %v836, %v884
        %886 = vmatmul.bf16.gmra.mxu0 %v512
        %v887 = vpop.f32.mrf.mxu0
        %v888 = vadd.f32 %v839, %v887
        %v889 = vpop.f32.mrf.mxu0
        %v890 = vadd.f32 %v841, %v889
        %891 = vmatmul.bf16.gmra.mxu0 %v514
        %v892 = vpop.f32.mrf.mxu0
        %v893 = vadd.f32 %v844, %v892
        %v894 = vpop.f32.mrf.mxu0
        %v895 = vadd.f32 %v846, %v894
        %896 = vmatmul.bf16.gmra.mxu0 %v516
        %v897 = vpop.f32.mrf.mxu0
        %v898 = vadd.f32 %v849, %v897
        %v899 = vpop.f32.mrf.mxu0
        %v900 = vadd.f32 %v851, %v899
        %901 = vmatmul.bf16.gmra.mxu0 %v518
        %v902 = vpop.f32.mrf.mxu0
        %v903 = vadd.f32 %v854, %v902
        %v904 = vpop.f32.mrf.mxu0
        %v905 = vadd.f32 %v856, %v904
        %906 = vmatmul.bf16.gmra.mxu0 %v520
        %v907 = vpop.f32.mrf.mxu0
        %v908 = vadd.f32 %v859, %v907
        %v909 = vpop.f32.mrf.mxu0
        %v910 = vadd.f32 %v861, %v909
        %911 = vmatmul.bf16.gmra.mxu0 %v522
        %v912 = vpop.f32.mrf.mxu0
        %v913 = vadd.f32 %v864, %v912
        %v914 = vpop.f32.mrf.mxu0
        %v915 = vadd.f32 %v866, %v914
        %916 = vdwg.mxu0
        %v917 = vmax.f32 %v780, 0.0
        %v918 = vmax.f32 %v878, 0.0
        %v919 = vmax.f32 %v782, 0.0
        %v920 = vmax.f32 %v880, 0.0
        %v921 = vmax.f32 %v785, 0.0
        %v922 = vmax.f32 %v883, 0.0
        %v923 = vmax.f32 %v787, 0.0
        %v924 = vmax.f32 %v885, 0.0
        %v925 = vmax.f32 %v790, 0.0
        %v926 = vmax.f32 %v888, 0.0
        %v927 = vmax.f32 %v792, 0.0
        %v928 = vmax.f32 %v890, 0.0
        %v929 = vmax.f32 %v795, 0.0
        %v930 = vmax.f32 %v893, 0.0
        %v931 = vmax.f32 %v797, 0.0
        %v932 = vmax.f32 %v895, 0.0
        %v933 = vmax.f32 %v800, 0.0
        %v934 = vmax.f32 %v898, 0.0
        %v935 = vmax.f32 %v802, 0.0
        %v936 = vmax.f32 %v900, 0.0
        %v937 = vmax.f32 %v805, 0.0
        %v938 = vmax.f32 %v903, 0.0
        %v939 = vmax.f32 %v807, 0.0
        %v940 = vmax.f32 %v905, 0.0
        %v941 = vmax.f32 %v810, 0.0
        %v942 = vmax.f32 %v908, 0.0
        %v943 = vmax.f32 %v812, 0.0
        %v944 = vmax.f32 %v910, 0.0
        %v945 = vmax.f32 %v815, 0.0
        %v946 = vmax.f32 %v913, 0.0
        %v947 = vmax.f32 %v817, 0.0
        %v948 = vmax.f32 %v915, 0.0
        %v949 = vpack.c.bf16 %v919, %v917
        %v950 = vpack.c.bf16 %v920, %v918
        %v951 = vpack.c.bf16 %v923, %v921
        %v952 = vpack.c.bf16 %v924, %v922
        %v953 = vpack.c.bf16 %v927, %v925
        %v954 = vpack.c.bf16 %v928, %v926
        %v955 = vpack.c.bf16 %v931, %v929
        %v956 = vpack.c.bf16 %v932, %v930
        %v957 = vpack.c.bf16 %v935, %v933
        %v958 = vpack.c.bf16 %v936, %v934
        %v959 = vpack.c.bf16 %v939, %v937
        %v960 = vpack.c.bf16 %v940, %v938
        %v961 = vpack.c.bf16 %v943, %v941
        %v962 = vpack.c.bf16 %v944, %v942
        %v963 = vpack.c.bf16 %v947, %v945
        %v964 = vpack.c.bf16 %v948, %v946
        %v965 = vld [vmem:[#allocation2] sm:$0xf]
        %v966 = vld [vmem:[#allocation2 + $0x4] sm:$0xf]
        %v967 = vld [vmem:[#allocation2 + $0x8] sm:$0xf]
        %v968 = vld [vmem:[#allocation2 + $0xc] sm:$0xf]
        %v969 = vld [vmem:[#allocation2 + $0x10] sm:$0xf]
        %v970 = vld [vmem:[#allocation2 + $0x14] sm:$0xf]
        %v971 = vld [vmem:[#allocation2 + $0x18] sm:$0xf]
        %v972 = vld [vmem:[#allocation2 + $0x1c] sm:$0xf]
        %v973 = vld [vmem:[#allocation2 + $0x20] sm:$0xf]
        %v974 = vld [vmem:[#allocation2 + $0x24] sm:$0xf]
        %v975 = vld [vmem:[#allocation2 + $0x28] sm:$0xf]
        %v976 = vld [vmem:[#allocation2 + $0x2c] sm:$0xf]
        %v977 = vld [vmem:[#allocation2 + $0x30] sm:$0xf]
        %v978 = vld [vmem:[#allocation2 + $0x34] sm:$0xf]
        %v979 = vld [vmem:[#allocation2 + $0x38] sm:$0xf]
        %v980 = vld [vmem:[#allocation2 + $0x3c] sm:$0xf]
        %v981 = vld [vmem:[#allocation2 + $0x40] sm:$0xf]
        %v982 = vld [vmem:[#allocation2 + $0x44] sm:$0xf]
        %v983 = vld [vmem:[#allocation2 + $0x48] sm:$0xf]
        %v984 = vld [vmem:[#allocation2 + $0x4c] sm:$0xf]
        %v985 = vld [vmem:[#allocation2 + $0x50] sm:$0xf]
        %v986 = vld [vmem:[#allocation2 + $0x54] sm:$0xf]
        %v987 = vld [vmem:[#allocation2 + $0x58] sm:$0xf]
        %v988 = vld [vmem:[#allocation2 + $0x5c] sm:$0xf]
        %v989 = vld [vmem:[#allocation2 + $0x60] sm:$0xf]
        %v990 = vld [vmem:[#allocation2 + $0x64] sm:$0xf]
        %v991 = vld [vmem:[#allocation2 + $0x68] sm:$0xf]
        %v992 = vld [vmem:[#allocation2 + $0x6c] sm:$0xf]
        %v993 = vld [vmem:[#allocation2 + $0x70] sm:$0xf]
        %v994 = vld [vmem:[#allocation2 + $0x74] sm:$0xf]
        %v995 = vld [vmem:[#allocation2 + $0x78] sm:$0xf]
        %v996 = vld [vmem:[#allocation2 + $0x7c] sm:$0xf]
        %v997 = vld [vmem:[%s6] sm:$0x1]
        %v999 = vperm.slane %v997, 0
        %v1033 = vunpack.c.l.b16 %v965
        %v1034 = vunpack.c.l.b16 %v966
        %v1035 = vunpack.c.l.b16 %v967
        %v1036 = vunpack.c.l.b16 %v968
        %v1037 = vunpack.c.l.b16 %v969
        %v1038 = vunpack.c.l.b16 %v970
        %v1039 = vunpack.c.l.b16 %v971
        %v1040 = vunpack.c.l.b16 %v972
        %v1041 = vunpack.c.l.b16 %v973
        %v1042 = vunpack.c.l.b16 %v974
        %v1043 = vunpack.c.l.b16 %v975
        %v1044 = vunpack.c.l.b16 %v976
        %v1045 = vunpack.c.l.b16 %v977
        %v1046 = vunpack.c.l.b16 %v978
        %v1047 = vunpack.c.l.b16 %v979
        %v1048 = vunpack.c.l.b16 %v980
        %v1049 = vunpack.c.l.b16 %v981
        %v1050 = vunpack.c.l.b16 %v982
        %v1051 = vunpack.c.l.b16 %v983
        %v1052 = vunpack.c.l.b16 %v984
        %v1053 = vunpack.c.l.b16 %v985
        %v1054 = vunpack.c.l.b16 %v986
        %v1055 = vunpack.c.l.b16 %v987
        %v1056 = vunpack.c.l.b16 %v988
        %v1057 = vunpack.c.l.b16 %v989
        %v1058 = vunpack.c.l.b16 %v990
        %v1059 = vunpack.c.l.b16 %v991
        %v1060 = vunpack.c.l.b16 %v992
        %v1061 = vunpack.c.l.b16 %v993
        %v1062 = vunpack.c.l.b16 %v994
        %v1063 = vunpack.c.l.b16 %v995
        %v1064 = vunpack.c.l.b16 %v996
        %v1065 = vpack.c.b16 %v1034, %v1033
        %v1066 = vpack.c.b16 %v1036, %v1035
        %v1067 = vpack.c.b16 %v1038, %v1037
        %v1068 = vpack.c.b16 %v1040, %v1039
        %v1069 = vpack.c.b16 %v1042, %v1041
        %v1070 = vpack.c.b16 %v1044, %v1043
        %v1071 = vpack.c.b16 %v1046, %v1045
        %v1072 = vpack.c.b16 %v1048, %v1047
        %v1073 = vpack.c.b16 %v1050, %v1049
        %v1074 = vpack.c.b16 %v1052, %v1051
        %v1075 = vpack.c.b16 %v1054, %v1053
        %v1076 = vpack.c.b16 %v1056, %v1055
        %v1077 = vpack.c.b16 %v1058, %v1057
        %v1078 = vpack.c.b16 %v1060, %v1059
        %v1079 = vpack.c.b16 %v1062, %v1061
        %v1080 = vpack.c.b16 %v1064, %v1063
        %1097 = vmatpush.bf16.msra.mxu0 %v1072
        %1098 = vmatpush.bf16.msra.mxu0 %v1071
        %1099 = vmatpush.bf16.msra.mxu0 %v1070
        %1100 = vmatpush.bf16.msra.mxu0 %v1069
        %1101 = vmatpush.bf16.msra.mxu0 %v1068
        %1102 = vmatpush.bf16.msra.mxu0 %v1067
        %1103 = vmatpush.bf16.msra.mxu0 %v1066
        %1104 = vmatpush.bf16.msra.mxu0 %v1065
        %1105 = vmatmul.bf16.gmra.mxu0 %v949
        %v1106 = vpop.f32.mrf.mxu0
        %v1107 = vadd.f32 %v999, %v1106
        %v1108 = vpop.f32.mrf.mxu0
        %v1109 = vadd.f32 %v999, %v1108
        %1110 = vmatmul.bf16.gmra.mxu0 %v951
        %v1111 = vpop.f32.mrf.mxu0
        %v1112 = vadd.f32 %v999, %v1111
        %v1113 = vpop.f32.mrf.mxu0
        %v1114 = vadd.f32 %v999, %v1113
        %1115 = vmatmul.bf16.gmra.mxu0 %v953
        %v1116 = vpop.f32.mrf.mxu0
        %v1117 = vadd.f32 %v999, %v1116
        %v1118 = vpop.f32.mrf.mxu0
        %v1119 = vadd.f32 %v999, %v1118
        %1120 = vmatmul.bf16.gmra.mxu0 %v955
        %v1121 = vpop.f32.mrf.mxu0
        %v1122 = vadd.f32 %v999, %v1121
        %v1123 = vpop.f32.mrf.mxu0
        %v1124 = vadd.f32 %v999, %v1123
        %1125 = vmatmul.bf16.gmra.mxu0 %v957
        %v1126 = vpop.f32.mrf.mxu0
        %v1127 = vadd.f32 %v999, %v1126
        %v1128 = vpop.f32.mrf.mxu0
        %v1129 = vadd.f32 %v999, %v1128
        %1130 = vmatmul.bf16.gmra.mxu0 %v959
        %v1131 = vpop.f32.mrf.mxu0
        %v1132 = vadd.f32 %v999, %v1131
        %v1133 = vpop.f32.mrf.mxu0
        %v1134 = vadd.f32 %v999, %v1133
        %1135 = vmatmul.bf16.gmra.mxu0 %v961
        %v1136 = vpop.f32.mrf.mxu0
        %v1137 = vadd.f32 %v999, %v1136
        %v1138 = vpop.f32.mrf.mxu0
        %v1139 = vadd.f32 %v999, %v1138
        %1140 = vmatmul.bf16.gmra.mxu0 %v963
        %v1141 = vpop.f32.mrf.mxu0
        %v1142 = vadd.f32 %v999, %v1141
        %v1143 = vpop.f32.mrf.mxu0
        %v1144 = vadd.f32 %v999, %v1143
        %1145 = vdwg.mxu0
        %1146 = vmatpush.bf16.msra.mxu0 %v1080
        %1147 = vmatpush.bf16.msra.mxu0 %v1079
        %1148 = vmatpush.bf16.msra.mxu0 %v1078
        %1149 = vmatpush.bf16.msra.mxu0 %v1077
        %1150 = vmatpush.bf16.msra.mxu0 %v1076
        %1151 = vmatpush.bf16.msra.mxu0 %v1075
        %1152 = vmatpush.bf16.msra.mxu0 %v1074
        %1153 = vmatpush.bf16.msra.mxu0 %v1073
        %1154 = vmatmul.bf16.gmra.mxu0 %v950
        %v1155 = vpop.f32.mrf.mxu0
        %v1156 = vadd.f32 %v1107, %v1155
        %v1157 = vpop.f32.mrf.mxu0
        %v1158 = vadd.f32 %v1109, %v1157
        %1159 = vmatmul.bf16.gmra.mxu0 %v952
        %v1160 = vpop.f32.mrf.mxu0
        %v1161 = vadd.f32 %v1112, %v1160
        %v1162 = vpop.f32.mrf.mxu0
        %v1163 = vadd.f32 %v1114, %v1162
        %1164 = vmatmul.bf16.gmra.mxu0 %v954
        %v1165 = vpop.f32.mrf.mxu0
        %v1166 = vadd.f32 %v1117, %v1165
        %v1167 = vpop.f32.mrf.mxu0
        %v1168 = vadd.f32 %v1119, %v1167
        %1169 = vmatmul.bf16.gmra.mxu0 %v956
        %v1170 = vpop.f32.mrf.mxu0
        %v1171 = vadd.f32 %v1122, %v1170
        %v1172 = vpop.f32.mrf.mxu0
        %v1173 = vadd.f32 %v1124, %v1172
        %1174 = vmatmul.bf16.gmra.mxu0 %v958
        %v1175 = vpop.f32.mrf.mxu0
        %v1176 = vadd.f32 %v1127, %v1175
        %v1177 = vpop.f32.mrf.mxu0
        %v1178 = vadd.f32 %v1129, %v1177
        %1179 = vmatmul.bf16.gmra.mxu0 %v960
        %v1180 = vpop.f32.mrf.mxu0
        %v1181 = vadd.f32 %v1132, %v1180
        %v1182 = vpop.f32.mrf.mxu0
        %v1183 = vadd.f32 %v1134, %v1182
        %1184 = vmatmul.bf16.gmra.mxu0 %v962
        %v1185 = vpop.f32.mrf.mxu0
        %v1186 = vadd.f32 %v1137, %v1185
        %v1187 = vpop.f32.mrf.mxu0
        %v1188 = vadd.f32 %v1139, %v1187
        %1189 = vmatmul.bf16.gmra.mxu0 %v964
        %v1190 = vpop.f32.mrf.mxu0
        %v1191 = vadd.f32 %v1142, %v1190
        %v1192 = vpop.f32.mrf.mxu0
        %v1193 = vadd.f32 %v1144, %v1192
        %1194 = vdwg.mxu0
        %v1195 = vtanh.pop %v1156
        %v1196 = vtanh.pop %v1158
        %v1197 = vtanh.pop %v1161
        %v1198 = vtanh.pop %v1163
        %v1199 = vtanh.pop %v1166
        %v1200 = vtanh.pop %v1168
        %v1201 = vtanh.pop %v1171
        %v1202 = vtanh.pop %v1173
        %v1203 = vtanh.pop %v1176
        %v1204 = vtanh.pop %v1178
        %v1205 = vtanh.pop %v1181
        %v1206 = vtanh.pop %v1183
        %v1207 = vtanh.pop %v1186
        %v1208 = vtanh.pop %v1188
        %v1209 = vtanh.pop %v1191
        %v1210 = vtanh.pop %v1193
        %1211 = vst [vmem:[%s289] sm:$0xff] %v1195
        %1212 = vst [vmem:[%s289 + $0x8] sm:$0xff] %v1196
        %1213 = vst [vmem:[%s289 + $0x10] sm:$0xff] %v1197
        %1214 = vst [vmem:[%s289 + $0x18] sm:$0xff] %v1198
        %1215 = vst [vmem:[%s289 + $0x20] sm:$0xff] %v1199
        %1216 = vst [vmem:[%s289 + $0x28] sm:$0xff] %v1200
        %1217 = vst [vmem:[%s289 + $0x30] sm:$0xff] %v1201
        %1218 = vst [vmem:[%s289 + $0x38] sm:$0xff] %v1202
        %1219 = vst [vmem:[%s289 + $0x40] sm:$0xff] %v1203
        %1220 = vst [vmem:[%s289 + $0x48] sm:$0xff] %v1204
        %1221 = vst [vmem:[%s289 + $0x50] sm:$0xff] %v1205
        %1222 = vst [vmem:[%s289 + $0x58] sm:$0xff] %v1206
        %1223 = vst [vmem:[%s289 + $0x60] sm:$0xff] %v1207
        %1224 = vst [vmem:[%s289 + $0x68] sm:$0xff] %v1208
        %1225 = vst [vmem:[%s289 + $0x70] sm:$0xff] %v1209
        %1226 = vst [vmem:[%s289 + $0x78] sm:$0xff] %v1210
        %s1227 = sand.u32 %s182, 1
        %s1228 = scalar_lea.sflag [#allocation4], %s1227
        %s1229 = sand.u32 %s182, 1
        %s1230 = smul.addr %s1229, 128
        %s1231 = scalar_lea.vmem [#allocation5], %s1230
        // Predicated region
        $region53: #{tpu_custom_call.1} parent=47 // pred_check
          %p1232 = pneg %p192
        $region54: #{tpu_custom_call.1} parent=47 // pred_check_branch
          %1234 = sbr.rel (%p1232) target = $region56
        $region55: #{tpu_custom_call.1} parent=47 // pred_region
          %s1235 = smul.u32 16, %s22
          %1237 = vsyncadd %s1228, 0
          %s1238 = smul.addr %s1235, 8
          %s1239 = scalar_lea.hbm %s7, %s1238
          %s1240 = sshll.u32 %s1231, 4
          %s1241 = int_to_ptr.vmem [resolvable:$true] %s1240
          %s1242 = sshll.u32 %s1239, 4
          %s1243 = int_to_ptr.hbm [resolvable:$true] %s1242
          %1248 = dma.vmem_to_hbm [thread:$0]  %s1241, 2048, %s1243, %s1228, 128, 128, 8
        $region56: #{tpu_custom_call.1} parent=47 // pred_fallthru
          _
      $region48: #{tpu_custom_call.1} parent=5 // pred_fallthru
        _
      %p1249 = scmp.le.s32.totalorder 2, %s17
      // Predicated region
      $region57: #{tpu_custom_call.1} parent=5 // pred_check
        %p1250 = pneg %p1249
      $region58: #{tpu_custom_call.1} parent=5 // pred_check_branch
        %1252 = sbr.rel (%p1250) target = $region60
      $region59: #{tpu_custom_call.1} parent=5 // pred_region
        %s1253 = ssub.s32 %s17, 2
        // Predicated region
        $region61: #{tpu_custom_call.1} parent=59 // pred_check
          %p1254 = pneg %p198
        $region62: #{tpu_custom_call.1} parent=59 // pred_check_branch
          %1256 = sbr.rel (%p1254) target = $region64
        $region63: #{tpu_custom_call.1} parent=59 // pred_region
          %s1257 = sand.u32 %s183, 1
          %s1258 = scalar_lea.sflag [#allocation4], %s1257
          %s1259 = sand.u32 %s183, 1
          %s1260 = smul.addr %s1259, 128
          %s1261 = scalar_lea.vmem [#allocation5], %s1260
          %1263 = dma.done %s1258, 2048
        $region64: #{tpu_custom_call.1} parent=59 // pred_fallthru
          _
      $region60: #{tpu_custom_call.1} parent=5 // pred_fallthru
        _
    $region6: #{tpu_custom_call.1} parent=1 // loop_footer
      %s21 = sadd.s32 1, %s17
    $region7: #{tpu_custom_call.1} parent=1 // loop_footer_branch
      %16 = sbr.rel target = $region3
    $region8: #{tpu_custom_call.1} parent=1 // loop_exit
      _
    %1264 = vsyncpa [#allocation3], 1
    %s1265 = scalar_lea.sflag [#allocation3], 1
    %1266 = vsyncpa %s1265, 1
    %1267 = vsyncpa [#allocation4], 1
    %s1268 = scalar_lea.sflag [#allocation4], 1
    %1269 = vsyncpa %s1268, 1

</llo_original>
